<compile_context>
chip_gen: v5e
topology: v5e:2x2
jax: 0.10.0
libtpu: 0.0.40
codegen_flags: <defaults>
</compile_context>

<pallas_src>
import jax
import jax.numpy as jnp
from jax.experimental import pallas as pl
from jax.experimental.pallas import tpu as pltpu


def _round_up(x, m):
    return ((x + m - 1) // m) * m


def _pick_tile(padded_dim, pref):
    """Largest multiple of 128 that divides `padded_dim` and is <= pref."""
    pref = max(128, (pref // 128) * 128)
    best = 128
    for t in range(128, padded_dim + 1, 128):
        if padded_dim % t == 0 and t <= pref:
            best = t
    return best


def prepare_conditional_linear_params(weights, biases, *, compute_dtype=jnp.bfloat16):
    """One-time (outside the hot path) pad + cast of all C layers' parameters.

    weights: (C, in_features, out_features) f32; biases: (C, out_features) f32.
    Returns w_padded (C, in_p, out_p) in compute_dtype and b_padded (C, 1, out_p)
    f32, with in_p/out_p rounded up to multiples of 128. Doing this once removes
    the dominant per-call O(C) HBM pad/cast traffic flagged in the perf review.
    """
    C, in_f, out_f = weights.shape
    in_p = _round_up(in_f, 128)
    out_p = _round_up(out_f, 128)
    if (in_p, out_p) == (in_f, out_f):
        w_p = weights.astype(compute_dtype)
    else:
        w_p = (jnp.zeros((C, in_p, out_p), compute_dtype)
               .at[:, :in_f, :out_f].set(weights.astype(compute_dtype)))
    if out_p == out_f:
        b_p = biases.astype(jnp.float32).reshape(C, 1, out_f)
    else:
        b_p = (jnp.zeros((C, 1, out_p), jnp.float32)
               .at[:, 0, :out_f].set(biases.astype(jnp.float32)))
    return w_p, b_p


def _make_kernel(tk, x_resident, use_acc):
    def kernel(scal_ref, x_ref, w_ref, b_ref, o_ref, *scratch):
        del scal_ref  # category index only drives the BlockSpec index_maps
        k = pl.program_id(2)
        # f32 outputs: accumulate straight into the resident output block.
        acc = scratch[0] if use_acc else o_ref

        @pl.when(k == 0)
        def _init():
            acc[...] = jnp.zeros_like(acc)

        if x_resident:
            start = pl.multiple_of(k * tk, 128)
            xk = x_ref[:, pl.ds(start, tk)]
        else:
            xk = x_ref[...]

        acc[...] += jnp.dot(xk, w_ref[...], preferred_element_type=jnp.float32)

        @pl.when(k == pl.num_programs(2) - 1)
        def _finalize():
            # Bias add + (optional) downcast once, at the last K step.
            # TODO(synk): training-mode Dropout(0.4) mask would go here.
            o_ref[...] = (acc[...] + b_ref[...]).astype(o_ref.dtype)

    return kernel


def conditional_linear(x, w_padded, b_padded, category_idx, *,
                       out_features=None, tm_pref=512, tk_pref=1024,
                       tn_pref=1024, n_splits=2, x_resident_max_bytes=4 * 2**20):
    """Hot path: dropout(ln_layers[category_idx](x)) with eval-mode dropout.

    x: (B, in_features); w_padded/b_padded from prepare_conditional_linear_params.
    Only the selected category's parameters are DMA'd from HBM.
    """
    B, in_f = x.shape
    C, in_p, out_p = w_padded.shape
    assert in_f <= in_p
    out_f = out_features if out_features is not None else out_p
    compute_dtype = w_padded.dtype
    out_dtype = x.dtype if x.dtype == jnp.bfloat16 else jnp.float32
    use_acc = out_dtype != jnp.float32  # bf16 output -> keep f32 scratch acc

    # --- tile selection ----------------------------------------------------
    # Batch: pad to a multiple of 16 (bf16 packs two rows per sublane); cap the
    # row tile so very large batches get an M grid axis (bounds VMEM, extra
    # parallel axis for megacore).
    tm = _round_up(min(tm_pref, _round_up(B, 16)), 16)
    Bp = _round_up(B, tm)
    # K / N: largest multiples of 128 dividing the padded dims (big weight DMAs).
    tk = _pick_tile(in_p, tk_pref)
    tn_cap = tn_pref
    if n_splits > 1 and out_p >= n_splits * 128:
        # Keep >= n_splits output tiles so the "parallel" N axis can split
        # across TensorCores on v7x; tiles stay lane-dense so near-free on
        # single-TC v5e/v6e.
        tn_cap = min(tn_cap, out_p // n_splits)
    tn = _pick_tile(out_p, tn_cap)

    # x stays resident in VMEM across the whole (N, K) sweep when small, so it
    # is DMA'd once per M tile instead of once per grid step.
    x_itemsize = jnp.dtype(compute_dtype).itemsize
    x_resident = tm * in_p * x_itemsize <= x_resident_max_bytes

    # --- activations: pad + cast (cheap, O(B*in_f)) --------------------------
    if (Bp, in_p) == (B, in_f) and x.dtype == compute_dtype:
        x_p = x
    else:
        x_p = (jnp.zeros((Bp, in_p), compute_dtype)
               .at[:B, :in_f].set(x.astype(compute_dtype)))

    # Clamp the category so the weight index_map can never issue an OOB DMA.
    cat = jnp.clip(jnp.asarray(category_idx, jnp.int32), 0, C - 1).reshape(1)

    grid = (Bp // tm, out_p // tn, in_p // tk)  # (M par, N par, K reduction last)

    if x_resident:
        x_spec = pl.BlockSpec((tm, in_p), lambda m, n, k, s: (m, 0))
    else:
        x_spec = pl.BlockSpec((tm, tk), lambda m, n, k, s: (m, k))

    grid_spec = pltpu.PrefetchScalarGridSpec(
        num_scalar_prefetch=1,
        grid=grid,
        in_specs=[
            x_spec,
            # Selected category's (k, n) weight tile; category dim squeezed.
            pl.BlockSpec((pl.Squeezed(), tk, tn), lambda m, n, k, s: (s[0], k, n)),
            # Selected category's bias tile.
            pl.BlockSpec((pl.Squeezed(), 1, tn), lambda m, n, k, s: (s[0], 0, n)),
        ],
        # Output block fixed across K -> resident accumulation target.
        out_specs=pl.BlockSpec((tm, tn), lambda m, n, k, s: (m, n)),
        scratch_shapes=([pltpu.VMEM((tm, tn), jnp.float32)] if use_acc else []),
    )

    # Scoped-VMEM budget from actual tile footprint (double-buffered streams).
    out_itemsize = jnp.dtype(out_dtype).itemsize
    vmem_needed = (2 * tk * tn * x_itemsize                                  # weights
                   + 2 * tn * 4                                              # bias
                   + (tm * in_p if x_resident else 2 * tm * tk) * x_itemsize  # x
                   + 2 * tm * tn * out_itemsize                              # output
                   + (tm * tn * 4 if use_acc else 0))                        # acc
    vmem_limit = int(min(64 * 2**20, max(16 * 2**20, 2 * vmem_needed)))

    out_padded = pl.pallas_call(
        _make_kernel(tk, x_resident, use_acc),
        out_shape=jax.ShapeDtypeStruct((Bp, out_p), out_dtype),
        grid_spec=grid_spec,
        compiler_params=pltpu.CompilerParams(
            dimension_semantics=("parallel", "parallel", "arbitrary"),
            vmem_limit_bytes=vmem_limit),
    )(cat, x_p, w_padded, b_padded)

    out = out_padded[:B, :out_f]
    return out if out.dtype == x.dtype else out.astype(x.dtype)


if __name__ == "__main__":
    num_categories = 4
    in_features = 32
    out_features = 32
    batch = 8

    key = jax.random.PRNGKey(0)
    kx, kw, kb, kx2, kw2, kb2, kx3 = jax.random.split(key, 7)

    # PyTorch Linear init: U(-1/sqrt(in), 1/sqrt(in)); weight stored (out, in).
    bound = 1.0 / (in_features ** 0.5)
    w_pt = jax.random.uniform(kw, (num_categories, out_features, in_features),
                              minval=-bound, maxval=bound, dtype=jnp.float32)
    weights = jnp.transpose(w_pt, (0, 2, 1))  # (C, in, out)
    biases = jax.random.uniform(kb, (num_categories, out_features),
                                minval=-bound, maxval=bound, dtype=jnp.float32)
    x = jax.random.normal(kx, (batch, in_features), dtype=jnp.float32)
    category_idx = 2

    # One-time parameter prep (outside the hot path); jitted hot path.
    w_p, b_p = prepare_conditional_linear_params(weights, biases)
    cond_lin = jax.jit(conditional_linear,
                       static_argnames=("out_features", "tm_pref", "tk_pref",
                                        "tn_pref", "n_splits"))

    out = cond_lin(x, w_p, b_p, jnp.int32(category_idx), out_features=out_features)
    out = jax.block_until_ready(out)

    # Reference (eval-mode dropout = identity) with the same bf16 operand
    # rounding the kernel uses; accumulation is f32 in both.
    xb = x.astype(jnp.bfloat16).astype(jnp.float32)
    wb = weights[category_idx].astype(jnp.bfloat16).astype(jnp.float32)
    ref = xb @ wb + biases[category_idx]
    assert jnp.allclose(out, ref, atol=1e-3, rtol=1e-3), "mismatch (small case)"

    # Second check: multi-tile grid (N=2 parallel, K=3 reduction) and the
    # resident-x in-kernel K slicing path.
    in2, out2, b2 = 384, 256, 16
    w2 = jax.random.normal(kw2, (num_categories, in2, out2), dtype=jnp.float32) * 0.05
    bi2 = jax.random.normal(kb2, (num_categories, out2), dtype=jnp.float32) * 0.05
    x2 = jax.random.normal(kx2, (b2, in2), dtype=jnp.float32)

    w2_p, b2_p = prepare_conditional_linear_params(w2, bi2)
    out2_arr = cond_lin(x2, w2_p, b2_p, jnp.int32(1), out_features=out2,
                        tk_pref=128, tn_pref=128)
    out2_arr = jax.block_until_ready(out2_arr)

    xb2 = x2.astype(jnp.bfloat16).astype(jnp.float32)
    wb2 = w2[1].astype(jnp.bfloat16).astype(jnp.float32)
    ref2 = xb2 @ wb2 + bi2[1]
    assert jnp.allclose(out2_arr, ref2, atol=5e-3, rtol=5e-3), "mismatch (tiled case)"

    # Third check: bf16 activations -> bf16 output emitted directly by the
    # kernel (f32 scratch accumulator path, no f32 writeback).
    x3 = jax.random.normal(kx3, (batch, in_features),
                           dtype=jnp.float32).astype(jnp.bfloat16)
    out3 = cond_lin(x3, w_p, b_p, jnp.int32(0), out_features=out_features)
    out3 = jax.block_until_ready(out3)
    assert out3.dtype == jnp.bfloat16
    ref3 = (x3.astype(jnp.float32)
            @ weights[0].astype(jnp.bfloat16).astype(jnp.float32) + biases[0])
    assert jnp.allclose(out3.astype(jnp.float32), ref3, atol=6e-2, rtol=6e-2), \
        "mismatch (bf16 output case)"

    print("KERNEL_OK")
</pallas_src>

<mosaic_0001>
module attributes {stable_mosaic.version = 11 : i64} {
  func.func @kernel(%arg0: i32, %arg1: i32, %arg2: i32, %arg3: memref<1xi32, #tpu.memory_space<smem>>, %arg4: memref<16x128xbf16, #tpu.memory_space<vmem>>, %arg5: memref<1x128x128xbf16, #tpu.memory_space<vmem>>, %arg6: memref<1x1x128xf32, #tpu.memory_space<vmem>>, %arg7: memref<16x128xf32, #tpu.memory_space<vmem>>) attributes {dimension_semantics = [#tpu.dimension_semantics<parallel>, #tpu.dimension_semantics<parallel>, #tpu.dimension_semantics<arbitrary>], iteration_bounds = array<i64: 1, 1, 1>, scalar_prefetch = 1 : i64, scratch_operands = 0 : i64, tpu.core_type = #tpu.core_type<tc>, window_params = [{transform_indices = @transform_0, window_bounds = array<i64: 16, 128>}, {transform_indices = @transform_1, window_bounds = array<i64: 1, 128, 128>}, {transform_indices = @transform_2, window_bounds = array<i64: 1, 1, 128>}, {transform_indices = @transform_3, window_bounds = array<i64: 16, 128>}]} {
    %c0_i32 = arith.constant 0 : i32
    %0 = arith.cmpi eq, %arg2, %c0_i32 : i32
    %1 = arith.extui %0 : i1 to i32
    %c0_i32_0 = arith.constant 0 : i32
    %2 = arith.cmpi ne, %1, %c0_i32_0 : i32
    scf.if %2 {
      %cst_10 = arith.constant 0.000000e+00 : f32
      %16 = vector.broadcast %cst_10 : f32 to vector<16x128xf32>
      %c0_11 = arith.constant 0 : index
      %c0_12 = arith.constant 0 : index
      %17 = vector.load %arg7[%c0_11, %c0_12] : memref<16x128xf32, #tpu.memory_space<vmem>>, vector<16x128xf32>
      tpu.vector_store %arg7[%c0_11, %c0_12], %16 {strides = array<i32>} : memref<16x128xf32, #tpu.memory_space<vmem>>, vector<16x128xf32>,
    } else {
    }
    %c128_i32 = arith.constant 128 : i32
    %3 = arith.muli %arg2, %c128_i32 : i32
    %4 = tpu.assume_multiple %3, 128 : i32
    %c0 = arith.constant 0 : index
    %5 = arith.index_cast %4 : i32 to index
    %6 = vector.load %arg4[%c0, %5] : memref<16x128xbf16, #tpu.memory_space<vmem>>, vector<16x128xbf16>
    %c0_1 = arith.constant 0 : index
    %c0_2 = arith.constant 0 : index
    %7 = vector.load %arg7[%c0_1, %c0_2] : memref<16x128xf32, #tpu.memory_space<vmem>>, vector<16x128xf32>
    %c0_3 = arith.constant 0 : index
    %c0_4 = arith.constant 0 : index
    %c0_5 = arith.constant 0 : index
    %8 = vector.load %arg5[%c0_3, %c0_4, %c0_5] : memref<1x128x128xbf16, #tpu.memory_space<vmem>>, vector<1x128x128xbf16>
    %9 = vector.shape_cast %8 : vector<1x128x128xbf16> to vector<128x128xbf16>
    %cst = arith.constant dense<0.000000e+00> : vector<16x128xf32>
    %10 = tpu.matmul %6, %9, %cst {dimension_numbers = #tpu.dot_dimension_numbers<[1], [0], [0], [1], [0, 0, 1, 1], [], []>} : vector<16x128xbf16>, vector<128x128xbf16>, vector<16x128xf32> -> vector<16x128xf32>
    %11 = arith.addf %7, %10 : vector<16x128xf32>
    %c0_6 = arith.constant 0 : index
    %c0_7 = arith.constant 0 : index
    %12 = vector.load %arg7[%c0_6, %c0_7] : memref<16x128xf32, #tpu.memory_space<vmem>>, vector<16x128xf32>
    tpu.vector_store %arg7[%c0_6, %c0_7], %11 {strides = array<i32>} : memref<16x128xf32, #tpu.memory_space<vmem>>, vector<16x128xf32>,
    %c0_i32_8 = arith.constant 0 : i32
    %13 = arith.cmpi eq, %arg2, %c0_i32_8 : i32
    %14 = arith.extui %13 : i1 to i32
    %c0_i32_9 = arith.constant 0 : i32
    %15 = arith.cmpi ne, %14, %c0_i32_9 : i32
    scf.if %15 {
      %c0_10 = arith.constant 0 : index
      %c0_11 = arith.constant 0 : index
      %16 = vector.load %arg7[%c0_10, %c0_11] : memref<16x128xf32, #tpu.memory_space<vmem>>, vector<16x128xf32>
      %c0_12 = arith.constant 0 : index
      %c0_13 = arith.constant 0 : index
      %c0_14 = arith.constant 0 : index
      %17 = vector.load %arg6[%c0_12, %c0_13, %c0_14] : memref<1x1x128xf32, #tpu.memory_space<vmem>>, vector<1x1x128xf32>
      %18 = vector.shape_cast %17 : vector<1x1x128xf32> to vector<1x128xf32>
      %19 = vector.broadcast %18 : vector<1x128xf32> to vector<16x128xf32>
      %20 = arith.addf %16, %19 : vector<16x128xf32>
      %c0_15 = arith.constant 0 : index
      %c0_16 = arith.constant 0 : index
      %21 = vector.load %arg7[%c0_15, %c0_16] : memref<16x128xf32, #tpu.memory_space<vmem>>, vector<16x128xf32>
      tpu.vector_store %arg7[%c0_15, %c0_16], %20 {strides = array<i32>} : memref<16x128xf32, #tpu.memory_space<vmem>>, vector<16x128xf32>,
    } else {
    }
    return
  }
  func.func @transform_0(%arg0: i32, %arg1: i32, %arg2: i32, %arg3: memref<1xi32, #tpu.memory_space<smem>>) -> (i32, i32) {
    %c0_i32 = arith.constant 0 : i32
    %c0_i32_0 = arith.constant 0 : i32
    return %arg0, %c0_i32 : i32, i32
  }
  func.func @transform_1(%arg0: i32, %arg1: i32, %arg2: i32, %arg3: memref<1xi32, #tpu.memory_space<smem>>) -> (i32, i32, i32) {
    %c0 = arith.constant 0 : index
    %0 = memref.load %arg3[%c0] : memref<1xi32, #tpu.memory_space<smem>>
    %c0_i32 = arith.constant 0 : i32
    return %0, %arg2, %arg1 : i32, i32, i32
  }
  func.func @transform_2(%arg0: i32, %arg1: i32, %arg2: i32, %arg3: memref<1xi32, #tpu.memory_space<smem>>) -> (i32, i32, i32) {
    %c0 = arith.constant 0 : index
    %0 = memref.load %arg3[%c0] : memref<1xi32, #tpu.memory_space<smem>>
    %c0_i32 = arith.constant 0 : i32
    %c0_i32_0 = arith.constant 0 : i32
    return %0, %c0_i32, %arg1 : i32, i32, i32
  }
  func.func @transform_3(%arg0: i32, %arg1: i32, %arg2: i32, %arg3: memref<1xi32, #tpu.memory_space<smem>>) -> (i32, i32) {
    %c0_i32 = arith.constant 0 : i32
    return %arg0, %arg1 : i32, i32
  }
}

</mosaic_0001>

<llo_original>
// kernel: conditional_linear.1
$region0: #{conditional_linear.1}
  #allocation0 [shape = 'u32[]', space=smem, size = 0x4, offset = 0x4, fixed_abs, tag = 'smem constant byte address 0x4 - core index']
  #allocation1 [shape = 'u32[72,128]{1,0:T(1,128)}', space=vmem, size = 0x9000, scoped, tag = 'internal scratch']
  #allocation2 [shape = 's32[1]{0}', space=sflag, size = 0x4, scoped, tag = 'scoped memory for conditional_linear.1']
  #allocation3 [shape = 's32[1]{0:T(128)S(6)}', space=smem, size = 0x200, scoped, tag = 'prefetched SMEM operand 0']
  %s0 = inlined_call_operand.<no memory space> [shape: s32[1], index: 0, kind: input, shape index: {}]
  %s1 = inlined_call_operand.vmem [shape: bf16[16,128], index: 1, kind: input, shape index: {}]
  %s2 = inlined_call_operand.hbm [shape: bf16[4,128,128], index: 2, kind: input, shape index: {}]
  %s3 = inlined_call_operand.vmem [shape: f32[4,1,128], index: 3, kind: input, shape index: {}]
  %s4 = inlined_call_operand.vmem [shape: f32[16,128], index: 4, kind: output, shape index: {}]
  %s5 = sld [smem:[#allocation0]]
  $region34: #{conditional_linear.1} parent=0
    _
  %s7 = ssub.s32 1, %s5
  %s8 = scalar_select 0, %s7, %s5
  %9 = sst [smem:[#allocation3]] %s0
  $region1: #{conditional_linear.1} parent=0
    #allocation4 [shape = 'u8[32768]{0}', space=vmem, size = 0x8000, scoped, tag = 'input window, operand 2, single buffered']
    #allocation5 [shape = 's32[1]{0}', space=sflag, size = 0x4, scoped, tag = 'scoped memory for conditional_linear.1']
    %10 = vsyncpa [#allocation5], 0
    // Predicated region
    $region2: #{conditional_linear.1} parent=1 // pred_check
      _
    $region3: #{conditional_linear.1} parent=1 // pred_check_branch
      %12 = sbr.rel (0) target = $region5
    $region4: #{conditional_linear.1} parent=1 // pred_region
      _
    $region5: #{conditional_linear.1} parent=1 // pred_fallthru
      _
    // Predicated region
    $region6: #{conditional_linear.1} parent=1 // pred_check
      _
    $region7: #{conditional_linear.1} parent=1 // pred_check_branch
      %14 = sbr.rel (0) target = $region9
    $region8: #{conditional_linear.1} parent=1 // pred_region
      %s15 = sld [smem:[#allocation3]]
      %17 = vsyncadd [#allocation5], 0
      %s18 = smul.addr %s15, 16
      %s19 = smul.addr %s18, 4
      %s20 = scalar_lea.hbm %s2, %s19
      %s21 = sshll.u32 %s20, 4
      %s22 = int_to_ptr.hbm [resolvable:$true] %s21
      %s23 = sshll.u32 [#allocation4], 4
      %s24 = int_to_ptr.vmem [resolvable:$true] %s23
      %29 = dma.hbm_to_vmem [thread:$0]  %s22, 1024, %s24, [#allocation5], 64, 64, 4
    $region9: #{conditional_linear.1} parent=1 // pred_fallthru
      _
    // Predicated region
    $region10: #{conditional_linear.1} parent=1 // pred_check
      _
    $region11: #{conditional_linear.1} parent=1 // pred_check_branch
      %31 = sbr.rel (0) target = $region13
    $region12: #{conditional_linear.1} parent=1 // pred_region
      %s32 = sld [smem:[#allocation3]]
      %p33 = scmp.lt.s32.totalorder %s32, 3
      %s34 = scalar_select %p33, %s32, 3
      %s35 = scalar_lea.vmem %s3, %s34
      %s36 = sld [smem:[#allocation3]]
    $region13: #{conditional_linear.1} parent=1 // pred_fallthru
      _
    // Predicated region
    $region14: #{conditional_linear.1} parent=1 // pred_check
      _
    $region15: #{conditional_linear.1} parent=1 // pred_check_branch
      %38 = sbr.rel (0) target = $region17
    $region16: #{conditional_linear.1} parent=1 // pred_region
      %40 = dma.done [#allocation5], 1024
    $region17: #{conditional_linear.1} parent=1 // pred_fallthru
      _
    %s41 = sld [smem:[#allocation3]]
    %p42 = scmp.lt.s32.totalorder %s41, 3
    %s43 = scalar_select %p42, %s41, 3
    %s44 = scalar_lea.vmem %s3, %s43
    %s45 = sld [smem:[#allocation3]]
    %s46 = sld [smem:[#allocation3]]
    %p47 = scmp.lt.s32.totalorder %s46, 3
    %s48 = scalar_select %p47, %s46, 3
    %s49 = scalar_lea.vmem %s3, %s48
    %s50 = sld [smem:[#allocation3]]
    %p51 = scmp.eq.s32.totalorder 0, 0
    // Predicated region
    $region18: #{conditional_linear.1} parent=1 // pred_check
      %p52 = pneg %p51
    $region19: #{conditional_linear.1} parent=1 // pred_check_branch
      %54 = sbr.rel (%p52) target = $region21
    $region20: #{conditional_linear.1} parent=1 // pred_region
      %55 = vst [vmem:[%s4] sm:$0xff] 0.0
      %56 = vst [vmem:[%s4 + $0x8] sm:$0xff] 0.0
    $region21: #{conditional_linear.1} parent=1 // pred_fallthru
      _
    %s57 = smul.u32 0, 128
    %s58 = sshra.s32 %s57, 7
    %s59 = sand.u32 %s57, 127
    %s60 = smul.addr %s58, 4
    %s61 = scalar_lea.vmem %s1, %s60
    %v62 = vld [vmem:[%s61] sm:$0xf]
    %v63 = vld [vmem:[%s61 + $0x4] sm:$0xf]
    %v64 = vld [vmem:[%s4] sm:$0xff]
    %v65 = vld [vmem:[%s4 + $0x8] sm:$0xff]
    %v66 = vld [vmem:[#allocation4] sm:$0xf]
    %v67 = vld [vmem:[#allocation4 + $0x4] sm:$0xf]
    %v68 = vld [vmem:[#allocation4 + $0x8] sm:$0xf]
    %v69 = vld [vmem:[#allocation4 + $0xc] sm:$0xf]
    %v70 = vld [vmem:[#allocation4 + $0x10] sm:$0xf]
    %v71 = vld [vmem:[#allocation4 + $0x14] sm:$0xf]
    %v72 = vld [vmem:[#allocation4 + $0x18] sm:$0xf]
    %v73 = vld [vmem:[#allocation4 + $0x1c] sm:$0xf]
    %v74 = vld [vmem:[#allocation4 + $0x20] sm:$0xf]
    %v75 = vld [vmem:[#allocation4 + $0x24] sm:$0xf]
    %v76 = vld [vmem:[#allocation4 + $0x28] sm:$0xf]
    %v77 = vld [vmem:[#allocation4 + $0x2c] sm:$0xf]
    %v78 = vld [vmem:[#allocation4 + $0x30] sm:$0xf]
    %v79 = vld [vmem:[#allocation4 + $0x34] sm:$0xf]
    %v80 = vld [vmem:[#allocation4 + $0x38] sm:$0xf]
    %v81 = vld [vmem:[#allocation4 + $0x3c] sm:$0xf]
    %v84 = vunpack.c.l.b16 %v62
    %v85 = vunpack.c.l.b16 %v63
    %v86 = vpack.c.b16 %v85, %v84
    %v104 = vunpack.c.l.b16 %v66
    %v105 = vunpack.c.l.b16 %v67
    %v106 = vunpack.c.l.b16 %v68
    %v107 = vunpack.c.l.b16 %v69
    %v108 = vunpack.c.l.b16 %v70
    %v109 = vunpack.c.l.b16 %v71
    %v110 = vunpack.c.l.b16 %v72
    %v111 = vunpack.c.l.b16 %v73
    %v112 = vunpack.c.l.b16 %v74
    %v113 = vunpack.c.l.b16 %v75
    %v114 = vunpack.c.l.b16 %v76
    %v115 = vunpack.c.l.b16 %v77
    %v116 = vunpack.c.l.b16 %v78
    %v117 = vunpack.c.l.b16 %v79
    %v118 = vunpack.c.l.b16 %v80
    %v119 = vunpack.c.l.b16 %v81
    %v120 = vpack.c.b16 %v105, %v104
    %v121 = vpack.c.b16 %v107, %v106
    %v122 = vpack.c.b16 %v109, %v108
    %v123 = vpack.c.b16 %v111, %v110
    %v124 = vpack.c.b16 %v113, %v112
    %v125 = vpack.c.b16 %v115, %v114
    %v126 = vpack.c.b16 %v117, %v116
    %v127 = vpack.c.b16 %v119, %v118
    %136 = vmatpush.bf16.msra.mxu0 %v127
    %137 = vmatpush.bf16.msra.mxu0 %v126
    %138 = vmatpush.bf16.msra.mxu0 %v125
    %139 = vmatpush.bf16.msra.mxu0 %v124
    %140 = vmatpush.bf16.msra.mxu0 %v123
    %141 = vmatpush.bf16.msra.mxu0 %v122
    %142 = vmatpush.bf16.msra.mxu0 %v121
    %143 = vmatpush.bf16.msra.mxu0 %v120
    %144 = vmatmul.bf16.gmra.mxu0 %v86
    %v145 = vpop.f32.mrf.mxu0
    %v146 = vadd.f32 0.0, %v145
    %v147 = vpop.f32.mrf.mxu0
    %v148 = vadd.f32 0.0, %v147
    %149 = vdwg.mxu0
    %v150 = vadd.f32 %v64, %v146
    %v151 = vadd.f32 %v65, %v148
    %152 = vst [vmem:[%s4] sm:$0xff] %v150
    %153 = vst [vmem:[%s4 + $0x8] sm:$0xff] %v151
    // Predicated region
    $region22: #{conditional_linear.1} parent=1 // pred_check
      %p154 = pneg %p51
    $region23: #{conditional_linear.1} parent=1 // pred_check_branch
      %156 = sbr.rel (%p154) target = $region25
    $region24: #{conditional_linear.1} parent=1 // pred_region
      %v157 = vld [vmem:[%s4] sm:$0xff]
      %v158 = vld [vmem:[%s4 + $0x8] sm:$0xff]
      %v159 = vld [vmem:[%s49] sm:$0x1]
      %v161 = vperm.slane %v159, 0
      %v163 = vadd.f32 %v157, %v161
      %v164 = vadd.f32 %v158, %v161
      %165 = vst [vmem:[%s4] sm:$0xff] %v163
      %166 = vst [vmem:[%s4 + $0x8] sm:$0xff] %v164
    $region25: #{conditional_linear.1} parent=1 // pred_fallthru
      _
    // Predicated region
    $region26: #{conditional_linear.1} parent=1 // pred_check
      _
    $region27: #{conditional_linear.1} parent=1 // pred_check_branch
      %168 = sbr.rel (0) target = $region29
    $region28: #{conditional_linear.1} parent=1 // pred_region
      _
    $region29: #{conditional_linear.1} parent=1 // pred_fallthru
      _
    // Predicated region
    $region30: #{conditional_linear.1} parent=1 // pred_check
      _
    $region31: #{conditional_linear.1} parent=1 // pred_check_branch
      %170 = sbr.rel (0) target = $region33
    $region32: #{conditional_linear.1} parent=1 // pred_region
      _
    $region33: #{conditional_linear.1} parent=1 // pred_fallthru
      _
    %171 = vsyncpa [#allocation5], 1

</llo_original>
